<compile_context>
chip_gen: v7x
topology: tpu7x:2x2x1
jax: 0.10.0
libtpu: 0.0.40
codegen_flags: <defaults>
</compile_context>

<pallas_src>
import jax
import jax.numpy as jnp
from jax import lax
from jax.experimental import pallas as pl
from jax.experimental.pallas import tpu as pltpu

_LANE = 128
_SUBLANE = 8


def _round_up(x, m):
    return (x + m - 1) // m * m


def _make_mlp_kernel(num_hidden_layers: int):
    """Fused MLP kernel: all layers for one batch tile in a single grid step."""

    def kernel(x_ref, *refs):
        out_ref = refs[-1]
        param_refs = refs[:-1]  # (w0, b0, w1, b1, ..., w_last_row, b_last)

        # Layer-0 consumes bf16 on the MXU; if the wrapper already fed bf16
        # this cast is a no-op.
        h = x_ref[...].astype(jnp.bfloat16)
        for layer in range(num_hidden_layers):
            w = param_refs[2 * layer][...]        # bf16 [d_in(_pad), d_out_pad]
            b = param_refs[2 * layer + 1][...]    # f32  [1, d_out_pad]
            h = jnp.dot(h, w, preferred_element_type=jnp.float32) + b
            # LeakyReLU(0.2) in f32 on the VPU.
            h = jnp.where(h > 0, h, 0.2 * h)
            # Dropout(0.3): identity in eval mode.
            # TODO(synk): training-mode dropout (pltpu.prng_random_bits mask) not implemented.
            if layer + 1 < num_hidden_layers:
                h = h.astype(jnp.bfloat16)

        # Final Linear(prev, 1) computed directly in packed orientation:
        # w_row [1, d] . h [tb, d] contracted on d -> z [1, tb]  (q@k.T pattern).
        h = h.astype(jnp.float32)                 # no-op when hidden layers exist
        w_row = param_refs[-2][...]               # f32 [1, d_last_pad]
        b_last = param_refs[-1][...]              # f32 [1, 1]
        z = lax.dot_general(w_row, h, (((1,), (1,)), ((), ())),
                            preferred_element_type=jnp.float32) + b_last

        # Numerically stable sigmoid; reciprocal on the EUP slot.
        ez = jnp.exp(-jnp.abs(z))
        r = pl.reciprocal(1.0 + ez, approx=True)
        prob = jnp.where(z >= 0, r, ez * r)       # [1, tb]

        out_ref[...] = prob.reshape(out_ref.shape).astype(out_ref.dtype)

    return kernel


def init_discriminator_params(key, feature_dim, hidden_dims):
    """nn.Linear-style init: U(-1/sqrt(in), 1/sqrt(in)); weights stored [in, out]."""
    dims = [feature_dim] + list(hidden_dims) + [1]
    params = []
    for i in range(len(dims) - 1):
        d_in, d_out = dims[i], dims[i + 1]
        key, kw, kb = jax.random.split(key, 3)
        bound = 1.0 / float(d_in) ** 0.5
        w = jax.random.uniform(kw, (d_in, d_out), jnp.float32, -bound, bound)
        b = jax.random.uniform(kb, (1, d_out), jnp.float32, -bound, bound)
        params.append((w, b))
    return params


def _pad_params(params, feature_dim):
    """Zero-pad hidden dims to lane multiples (feature dim stays unpadded);
    hidden weights in bf16, final layer stored as an f32 row."""
    n = len(params)
    prev = feature_dim
    padded = []
    for i, (w, b) in enumerate(params):
        d_in, d_out = w.shape
        if i < n - 1:
            d_out_pad = _round_up(d_out, _LANE)
            w_p = jnp.zeros((prev, d_out_pad), jnp.bfloat16)
            w_p = w_p.at[:d_in, :d_out].set(w.astype(jnp.bfloat16))
            b_p = jnp.zeros((1, d_out_pad), jnp.float32).at[:, :d_out].set(b)
            padded.append((w_p, b_p))
            prev = d_out_pad
        else:
            w_row = jnp.zeros((1, prev), jnp.float32)
            w_row = w_row.at[:, :d_in].set(w.reshape(1, d_in).astype(jnp.float32))
            b_p = b.reshape(1, 1).astype(jnp.float32)
            padded.append((w_row, b_p))
    return padded


def discriminator_forward(x, params, *, batch_tile=8192, interpret=False):
    """x: [B, feature_dim] float -> [B, 1] f32 probabilities (eval-mode forward)."""
    B, F = x.shape
    n_layers = len(params)
    padded_params = _pad_params(params, F)

    max_hidden_pad = max([w.shape[1] for (w, _) in padded_params[:-1]] + [_LANE])
    params_bytes = sum(int(w.size) * w.dtype.itemsize + int(b.size) * b.dtype.itemsize
                       for (w, b) in padded_params)

    # Batch-tile sizing: resident (double-buffered) params + double-buffered
    # x/out tiles + ~3 live f32 intermediates, kept under 24 MiB (safe inside
    # the 32 MiB scoped VMEM limit on v7x; conservative on v5e/v6e).
    budget = 24 * 1024 * 1024

    def vmem_use(t):
        return (2 * params_bytes
                + 2 * t * F * 4                       # x tile (worst case f32)
                + 2 * t * 4                           # packed out tile
                + 3 * t * max_hidden_pad * 4)         # live f32 intermediates

    tb = max(_SUBLANE, _round_up(min(batch_tile, B), _SUBLANE))
    while tb > _SUBLANE and vmem_use(tb) > budget:
        tb = max(_SUBLANE, (tb // 2 // _SUBLANE) * _SUBLANE)
    # >= 2 grid steps where possible (v7x megacore), then rebalance the tile so
    # the batch-tail padding is minimal.
    tb = min(tb, max(_SUBLANE, _round_up(pl.cdiv(B, 2), _SUBLANE)))
    nb = pl.cdiv(B, tb)
    tb = max(_SUBLANE, _round_up(pl.cdiv(B, nb), _SUBLANE))
    b_pad = nb * tb

    if b_pad != B:
        # Single small copy for the batch tail; fold the bf16 cast into it.
        x_p = jnp.pad(x.astype(jnp.bfloat16), ((0, b_pad - B), (0, 0)))
    else:
        # No copy: feed x as-is (kernel casts to bf16 for the MXU).
        x_p = x

    flat_inputs = [x_p]
    in_specs = [pl.BlockSpec((tb, F), lambda i: (i, 0))]
    for w, b in padded_params:
        flat_inputs.extend([w, b])
        # Constant index_maps: params stay resident in VMEM across grid steps.
        in_specs.append(pl.BlockSpec(w.shape, lambda i: (0, 0)))
        in_specs.append(pl.BlockSpec(b.shape, lambda i: (0, 0)))

    # Packed, lane-dense output: one f32 per row, tb results per grid step.
    out_shape = jax.ShapeDtypeStruct((nb, 1, tb), jnp.float32)
    out_spec = pl.BlockSpec((1, 1, tb), lambda i: (i, 0, 0))

    flops = 2 * B * sum(int(w.size) for (w, _) in params)
    bytes_accessed = int(x.size) * x.dtype.itemsize + B * 4 + params_bytes
    cost = pl.CostEstimate(flops=flops, transcendentals=B,
                           bytes_accessed=bytes_accessed)

    fn = pl.pallas_call(
        _make_mlp_kernel(n_layers - 1),
        out_shape=out_shape,
        grid=(nb,),
        in_specs=in_specs,
        out_specs=out_spec,
        compiler_params=pltpu.CompilerParams(
            dimension_semantics=("parallel",),
            vmem_limit_bytes=32 * 1024 * 1024),
        cost_estimate=cost,
        interpret=interpret,
    )
    y = fn(*flat_inputs)
    return y.reshape(b_pad)[:B].reshape(B, 1)


def _reference_forward(x, params):
    """Pure-JAX reference matching the kernel's bf16-matmul / f32-accumulate math."""
    h = x.astype(jnp.float32)
    n = len(params)
    for i, (w, b) in enumerate(params):
        if i < n - 1:
            h = jnp.dot(h.astype(jnp.bfloat16), w.astype(jnp.bfloat16),
                        preferred_element_type=jnp.float32) + b
            h = jnp.where(h > 0, h, 0.2 * h)
        else:
            h = h @ w + b
    return jax.nn.sigmoid(h)


if __name__ == "__main__":
    feature_dim = 32
    hidden_dims = [32, 16]

    key = jax.random.PRNGKey(0)
    key, kp = jax.random.split(key)
    params = init_discriminator_params(kp, feature_dim, hidden_dims)

    # Small batch (single tile) and a larger ragged batch (multi-tile grid path).
    for batch in (8, 600):
        key, kx = jax.random.split(key)
        x = jax.random.normal(kx, (batch, feature_dim), dtype=jnp.float32)

        out = jax.block_until_ready(discriminator_forward(x, params))
        ref = _reference_forward(x, params)

        assert out.shape == (batch, 1), out.shape
        err = float(jnp.max(jnp.abs(out - ref)))
        assert err < 5e-3, f"max abs err {err} for batch={batch}"

    print("KERNEL_OK")
</pallas_src>

<mosaic_0001>
module attributes {stable_mosaic.version = 11 : i64} {
  func.func @kernel(%arg0: i32, %arg1: memref<8x32xf32, #tpu.memory_space<vmem>>, %arg2: memref<32x128xbf16, #tpu.memory_space<vmem>>, %arg3: memref<1x128xf32, #tpu.memory_space<vmem>>, %arg4: memref<128x128xbf16, #tpu.memory_space<vmem>>, %arg5: memref<1x128xf32, #tpu.memory_space<vmem>>, %arg6: memref<1x128xf32, #tpu.memory_space<vmem>>, %arg7: memref<1x1xf32, #tpu.memory_space<vmem>>, %arg8: memref<1x1x8xf32, #tpu.memory_space<vmem>>) attributes {dimension_semantics = [#tpu.dimension_semantics<parallel>], iteration_bounds = array<i64: 1>, scalar_prefetch = 0 : i64, scratch_operands = 0 : i64, tpu.core_type = #tpu.core_type<tc>, window_params = [{transform_indices = @transform_0, window_bounds = array<i64: 8, 32>}, {pipeline_mode = #tpu.pipeline_mode<synchronous>, transform_indices = @transform_1, window_bounds = array<i64: 32, 128>}, {pipeline_mode = #tpu.pipeline_mode<synchronous>, transform_indices = @transform_2, window_bounds = array<i64: 1, 128>}, {pipeline_mode = #tpu.pipeline_mode<synchronous>, transform_indices = @transform_3, window_bounds = array<i64: 128, 128>}, {pipeline_mode = #tpu.pipeline_mode<synchronous>, transform_indices = @transform_4, window_bounds = array<i64: 1, 128>}, {pipeline_mode = #tpu.pipeline_mode<synchronous>, transform_indices = @transform_5, window_bounds = array<i64: 1, 128>}, {pipeline_mode = #tpu.pipeline_mode<synchronous>, transform_indices = @transform_6, window_bounds = array<i64: 1, 1>}, {transform_indices = @transform_7, window_bounds = array<i64: 1, 1, 8>}]} {
    %c0 = arith.constant 0 : index
    %c0_0 = arith.constant 0 : index
    %0 = vector.load %arg1[%c0, %c0_0] : memref<8x32xf32, #tpu.memory_space<vmem>>, vector<8x32xf32>
    %1 = arith.truncf %0 : vector<8x32xf32> to vector<8x32xbf16>
    %c0_1 = arith.constant 0 : index
    %c0_2 = arith.constant 0 : index
    %2 = vector.load %arg2[%c0_1, %c0_2] : memref<32x128xbf16, #tpu.memory_space<vmem>>, vector<32x128xbf16>
    %c0_3 = arith.constant 0 : index
    %c0_4 = arith.constant 0 : index
    %3 = vector.load %arg3[%c0_3, %c0_4] : memref<1x128xf32, #tpu.memory_space<vmem>>, vector<1x128xf32>
    %cst = arith.constant dense<0.000000e+00> : vector<8x128xf32>
    %4 = tpu.matmul %1, %2, %cst {dimension_numbers = #tpu.dot_dimension_numbers<[1], [0], [0], [1], [0, 0, 1, 1], [], []>} : vector<8x32xbf16>, vector<32x128xbf16>, vector<8x128xf32> -> vector<8x128xf32>
    %5 = vector.broadcast %3 : vector<1x128xf32> to vector<8x128xf32>
    %6 = arith.addf %4, %5 : vector<8x128xf32>
    %cst_5 = arith.constant 0.000000e+00 : f32
    %7 = vector.broadcast %cst_5 : f32 to vector<8x128xf32>
    %8 = arith.cmpf ogt, %6, %7 : vector<8x128xf32>
    %cst_6 = arith.constant 2.000000e-01 : f32
    %9 = vector.broadcast %cst_6 : f32 to vector<8x128xf32>
    %10 = arith.mulf %9, %6 : vector<8x128xf32>
    %11 = arith.select %8, %6, %10 : vector<8x128xi1>, vector<8x128xf32>
    %12 = arith.truncf %11 : vector<8x128xf32> to vector<8x128xbf16>
    %c0_7 = arith.constant 0 : index
    %c0_8 = arith.constant 0 : index
    %13 = vector.load %arg4[%c0_7, %c0_8] : memref<128x128xbf16, #tpu.memory_space<vmem>>, vector<128x128xbf16>
    %c0_9 = arith.constant 0 : index
    %c0_10 = arith.constant 0 : index
    %14 = vector.load %arg5[%c0_9, %c0_10] : memref<1x128xf32, #tpu.memory_space<vmem>>, vector<1x128xf32>
    %cst_11 = arith.constant dense<0.000000e+00> : vector<8x128xf32>
    %15 = tpu.matmul %12, %13, %cst_11 {dimension_numbers = #tpu.dot_dimension_numbers<[1], [0], [0], [1], [0, 0, 1, 1], [], []>} : vector<8x128xbf16>, vector<128x128xbf16>, vector<8x128xf32> -> vector<8x128xf32>
    %16 = vector.broadcast %14 : vector<1x128xf32> to vector<8x128xf32>
    %17 = arith.addf %15, %16 : vector<8x128xf32>
    %cst_12 = arith.constant 0.000000e+00 : f32
    %18 = vector.broadcast %cst_12 : f32 to vector<8x128xf32>
    %19 = arith.cmpf ogt, %17, %18 : vector<8x128xf32>
    %cst_13 = arith.constant 2.000000e-01 : f32
    %20 = vector.broadcast %cst_13 : f32 to vector<8x128xf32>
    %21 = arith.mulf %20, %17 : vector<8x128xf32>
    %22 = arith.select %19, %17, %21 : vector<8x128xi1>, vector<8x128xf32>
    %c0_14 = arith.constant 0 : index
    %c0_15 = arith.constant 0 : index
    %23 = vector.load %arg6[%c0_14, %c0_15] : memref<1x128xf32, #tpu.memory_space<vmem>>, vector<1x128xf32>
    %c0_16 = arith.constant 0 : index
    %c0_17 = arith.constant 0 : index
    %24 = vector.load %arg7[%c0_16, %c0_17] : memref<1x1xf32, #tpu.memory_space<vmem>>, vector<1x1xf32>
    %cst_18 = arith.constant dense<0.000000e+00> : vector<1x8xf32>
    %25 = tpu.matmul %23, %22, %cst_18 {dimension_numbers = #tpu.dot_dimension_numbers<[1], [1], [0], [0], [0, 0, 1, 0], [], []>} : vector<1x128xf32>, vector<8x128xf32>, vector<1x8xf32> -> vector<1x8xf32>
    %26 = vector.broadcast %24 : vector<1x1xf32> to vector<1x8xf32>
    %27 = arith.addf %25, %26 : vector<1x8xf32>
    %28 = math.absf %27 : vector<1x8xf32>
    %cst_19 = arith.constant 0.000000e+00 : f32
    %29 = vector.broadcast %cst_19 : f32 to vector<1x8xf32>
    %30 = arith.subf %29, %28 : vector<1x8xf32>
    %31 = math.exp %30 : vector<1x8xf32>
    %cst_20 = arith.constant 1.000000e+00 : f32
    %32 = vector.broadcast %cst_20 : f32 to vector<1x8xf32>
    %33 = arith.addf %32, %31 : vector<1x8xf32>
    %34 = tpu.reciprocal %33 {approx = true} : vector<1x8xf32> -> vector<1x8xf32>
    %cst_21 = arith.constant 0.000000e+00 : f32
    %35 = vector.broadcast %cst_21 : f32 to vector<1x8xf32>
    %36 = arith.cmpf oge, %27, %35 : vector<1x8xf32>
    %37 = arith.mulf %31, %34 : vector<1x8xf32>
    %38 = arith.select %36, %34, %37 : vector<1x8xi1>, vector<1x8xf32>
    %39 = vector.shape_cast %38 : vector<1x8xf32> to vector<1x1x8xf32>
    %c0_22 = arith.constant 0 : index
    %c0_23 = arith.constant 0 : index
    %c0_24 = arith.constant 0 : index
    %40 = vector.load %arg8[%c0_22, %c0_23, %c0_24] : memref<1x1x8xf32, #tpu.memory_space<vmem>>, vector<1x1x8xf32>
    tpu.vector_store %arg8[%c0_22, %c0_23, %c0_24], %39 {strides = array<i32>} : memref<1x1x8xf32, #tpu.memory_space<vmem>>, vector<1x1x8xf32>,
    return
  }
  func.func @transform_0(%arg0: i32) -> (i32, i32) {
    %c0_i32 = arith.constant 0 : i32
    %c0_i32_0 = arith.constant 0 : i32
    return %arg0, %c0_i32 : i32, i32
  }
  func.func @transform_1(%arg0: i32) -> (i32, i32) {
    %c0_i32 = arith.constant 0 : i32
    %c0_i32_0 = arith.constant 0 : i32
    %c0_i32_1 = arith.constant 0 : i32
    return %c0_i32, %c0_i32_0 : i32, i32
  }
  func.func @transform_2(%arg0: i32) -> (i32, i32) {
    %c0_i32 = arith.constant 0 : i32
    %c0_i32_0 = arith.constant 0 : i32
    %c0_i32_1 = arith.constant 0 : i32
    return %c0_i32, %c0_i32_0 : i32, i32
  }
  func.func @transform_3(%arg0: i32) -> (i32, i32) {
    %c0_i32 = arith.constant 0 : i32
    %c0_i32_0 = arith.constant 0 : i32
    %c0_i32_1 = arith.constant 0 : i32
    return %c0_i32, %c0_i32_0 : i32, i32
  }
  func.func @transform_4(%arg0: i32) -> (i32, i32) {
    %c0_i32 = arith.constant 0 : i32
    %c0_i32_0 = arith.constant 0 : i32
    %c0_i32_1 = arith.constant 0 : i32
    return %c0_i32, %c0_i32_0 : i32, i32
  }
  func.func @transform_5(%arg0: i32) -> (i32, i32) {
    %c0_i32 = arith.constant 0 : i32
    %c0_i32_0 = arith.constant 0 : i32
    %c0_i32_1 = arith.constant 0 : i32
    return %c0_i32, %c0_i32_0 : i32, i32
  }
  func.func @transform_6(%arg0: i32) -> (i32, i32) {
    %c0_i32 = arith.constant 0 : i32
    %c0_i32_0 = arith.constant 0 : i32
    %c0_i32_1 = arith.constant 0 : i32
    return %c0_i32, %c0_i32_0 : i32, i32
  }
  func.func @transform_7(%arg0: i32) -> (i32, i32, i32) {
    %c0_i32 = arith.constant 0 : i32
    %c0_i32_0 = arith.constant 0 : i32
    %c0_i32_1 = arith.constant 0 : i32
    return %arg0, %c0_i32, %c0_i32_0 : i32, i32, i32
  }
}

</mosaic_0001>

<llo_original>
// kernel: tpu_custom_call.1
$region0: #{tpu_custom_call.1}
  #allocation0 [shape = 'u32[]', space=smem, size = 0x4, offset = 0x4, fixed_abs, tag = 'smem constant byte address 0x4 - core index']
  #allocation1 [shape = 'u32[144,128]{1,0:T(1,128)}', space=vmem, size = 0x12000, scoped, tag = 'internal scratch']
  #allocation2 [shape = 'f32[1,1]{1,0:T(1,128)S(1)}', space=vmem, size = 0x200, scoped, tag = 'scoped memory for tpu_custom_call.1']
  %s0 = inlined_call_operand.hbm [shape: f32[8,32], index: 0, kind: input, shape index: {}]
  %s1 = inlined_call_operand.hbm [shape: bf16[32,128], index: 1, kind: input, shape index: {}]
  %s2 = inlined_call_operand.vmem [shape: f32[1,128], index: 2, kind: input, shape index: {}]
  %s3 = inlined_call_operand.hbm [shape: bf16[128,128], index: 3, kind: input, shape index: {}]
  %s4 = inlined_call_operand.vmem [shape: f32[1,128], index: 4, kind: input, shape index: {}]
  %s5 = inlined_call_operand.vmem [shape: f32[1,128], index: 5, kind: input, shape index: {}]
  %s6 = inlined_call_operand.<no memory space> [shape: f32[1,1], index: 6, kind: input, shape index: {}]
  %s7 = inlined_call_operand.hbm [shape: f32[1,1,8], index: 7, kind: output, shape index: {}]
  %s8 = sld [smem:[#allocation0]]
  $region50: #{tpu_custom_call.1} parent=0
    _
  %s10 = ssub.s32 1, %s8
  %s11 = scalar_select 0, %s10, %s8
  %v12 = vstv %s6
  %13 = vst [vmem:[#allocation2] sm:$0x1] %v12
  $region1: #{tpu_custom_call.1} parent=0
    #allocation3 [shape = 'u8[4096]{0}', space=vmem, size = 0x1000, scoped, tag = 'input window, operand 0, single buffered']
    #allocation4 [shape = 's32[1]{0}', space=sflag, size = 0x4, scoped, tag = 'scoped memory for tpu_custom_call.1']
    #allocation5 [shape = 's32[1]{0}', space=sflag, size = 0x4, scoped, tag = 'scoped memory for tpu_custom_call.1']
    #allocation6 [shape = 'u8[8192]{0}', space=vmem, size = 0x2000, scoped, tag = 'input window, operand 1, single buffered']
    #allocation7 [shape = 's32[1]{0}', space=sflag, size = 0x4, scoped, tag = 'scoped memory for tpu_custom_call.1']
    #allocation8 [shape = 'u8[32768]{0}', space=vmem, size = 0x8000, scoped, tag = 'input window, operand 3, single buffered']
    #allocation9 [shape = 'u8[512]{0}', space=vmem, size = 0x400, scoped, tag = 'output window, operand 0, single buffered']
    %14 = vsyncpa [#allocation4], 0
    %15 = vsyncpa [#allocation7], 0
    %16 = vsyncpa [#allocation5], 0
    // Predicated region
    $region2: #{tpu_custom_call.1} parent=1 // pred_check
      _
    $region3: #{tpu_custom_call.1} parent=1 // pred_check_branch
      %18 = sbr.rel (0) target = $region5
    $region4: #{tpu_custom_call.1} parent=1 // pred_region
      %s20 = ssub.s32 128, 128
      %21 = vsyncadd [#allocation4], %s20
      %s23 = sshll.u32 [#allocation3], 4
      %s24 = int_to_ptr.vmem [resolvable:$true] %s23
      %26 = dma.hbm_to_vmem [thread:$0]  %s0, 128, %s24, [#allocation4]
    $region5: #{tpu_custom_call.1} parent=1 // pred_fallthru
      _
    // Predicated region
    $region6: #{tpu_custom_call.1} parent=1 // pred_check
      _
    $region7: #{tpu_custom_call.1} parent=1 // pred_check_branch
      %28 = sbr.rel (0) target = $region9
    $region8: #{tpu_custom_call.1} parent=1 // pred_region
      %s30 = ssub.s32 256, 256
      %31 = vsyncadd [#allocation7], %s30
      %s32 = sshll.u32 [#allocation6], 4
      %s33 = int_to_ptr.vmem [resolvable:$true] %s32
      %38 = dma.hbm_to_vmem [thread:$0]  %s1, 256, %s33, [#allocation7], 64, 64, 4
    $region9: #{tpu_custom_call.1} parent=1 // pred_fallthru
      _
    // Predicated region
    $region10: #{tpu_custom_call.1} parent=1 // pred_check
      _
    $region11: #{tpu_custom_call.1} parent=1 // pred_check_branch
      %40 = sbr.rel (0) target = $region13
    $region12: #{tpu_custom_call.1} parent=1 // pred_region
      _
    $region13: #{tpu_custom_call.1} parent=1 // pred_fallthru
      _
    // Predicated region
    $region14: #{tpu_custom_call.1} parent=1 // pred_check
      _
    $region15: #{tpu_custom_call.1} parent=1 // pred_check_branch
      %42 = sbr.rel (0) target = $region17
    $region16: #{tpu_custom_call.1} parent=1 // pred_region
      %s44 = ssub.s32 1024, 1024
      %45 = vsyncadd [#allocation7], %s44
      %s46 = sshll.u32 [#allocation8], 4
      %s47 = int_to_ptr.vmem [resolvable:$true] %s46
      %52 = dma.hbm_to_vmem [thread:$0]  %s3, 1024, %s47, [#allocation7], 64, 64, 4
    $region17: #{tpu_custom_call.1} parent=1 // pred_fallthru
      _
    // Predicated region
    $region18: #{tpu_custom_call.1} parent=1 // pred_check
      _
    $region19: #{tpu_custom_call.1} parent=1 // pred_check_branch
      %54 = sbr.rel (0) target = $region21
    $region20: #{tpu_custom_call.1} parent=1 // pred_region
      _
    $region21: #{tpu_custom_call.1} parent=1 // pred_fallthru
      _
    // Predicated region
    $region22: #{tpu_custom_call.1} parent=1 // pred_check
      _
    $region23: #{tpu_custom_call.1} parent=1 // pred_check_branch
      %56 = sbr.rel (0) target = $region25
    $region24: #{tpu_custom_call.1} parent=1 // pred_region
      _
    $region25: #{tpu_custom_call.1} parent=1 // pred_fallthru
      _
    // Predicated region
    $region26: #{tpu_custom_call.1} parent=1 // pred_check
      _
    $region27: #{tpu_custom_call.1} parent=1 // pred_check_branch
      %58 = sbr.rel (0) target = $region29
    $region28: #{tpu_custom_call.1} parent=1 // pred_region
      _
    $region29: #{tpu_custom_call.1} parent=1 // pred_fallthru
      _
    // Predicated region
    $region30: #{tpu_custom_call.1} parent=1 // pred_check
      _
    $region31: #{tpu_custom_call.1} parent=1 // pred_check_branch
      %60 = sbr.rel (0) target = $region33
    $region32: #{tpu_custom_call.1} parent=1 // pred_region
      %61 = dma.done [#allocation4], 128
    $region33: #{tpu_custom_call.1} parent=1 // pred_fallthru
      _
    // Predicated region
    $region34: #{tpu_custom_call.1} parent=1 // pred_check
      _
    $region35: #{tpu_custom_call.1} parent=1 // pred_check_branch
      %63 = sbr.rel (0) target = $region37
    $region36: #{tpu_custom_call.1} parent=1 // pred_region
      %64 = dma.done [#allocation7], 256
    $region37: #{tpu_custom_call.1} parent=1 // pred_fallthru
      _
    // Predicated region
    $region38: #{tpu_custom_call.1} parent=1 // pred_check
      _
    $region39: #{tpu_custom_call.1} parent=1 // pred_check_branch
      %66 = sbr.rel (0) target = $region41
    $region40: #{tpu_custom_call.1} parent=1 // pred_region
      %67 = dma.done [#allocation7], 1024
    $region41: #{tpu_custom_call.1} parent=1 // pred_fallthru
      _
    %v69 = vld [vmem:[#allocation3] sm:$0xff]
    %v70 = vpack.c.bf16 %v69, %v69
    %v71 = vld [vmem:[#allocation6] sm:$0xf]
    %v72 = vld [vmem:[#allocation6 + $0x4] sm:$0xf]
    %v73 = vld [vmem:[#allocation6 + $0x8] sm:$0xf]
    %v74 = vld [vmem:[#allocation6 + $0xc] sm:$0xf]
    %v75 = vld [vmem:[%s2] sm:$0x1]
    %v77 = vlaneseq
    %v78 = vshrl.u32 %v77, 7
    %v79 = vsub.s32 0, %v78
    %v80 = vrot.slane %v75, %v79
    %v86 = vunpack.c.l.b16 %v71
    %v87 = vunpack.c.l.b16 %v72
    %v88 = vunpack.c.l.b16 %v73
    %v89 = vunpack.c.l.b16 %v74
    %v90 = vpack.c.b16 %v87, %v86
    %v91 = vpack.c.b16 %v89, %v88
    %vm94 = vcmask 261120
    %v96 = vsel %vm94, %v70, 0
    %98 = vmatprep.subr.bf16.mxu0 0
    %99 = vmatpush1.bf16.msra.mxu0 %v90
    %100 = vmatprep.subr.bf16.mxu0 0
    %101 = vmatpush1.bf16.msra.mxu0 %v91
    %102 = vmatprep.subr.bf16.mxu0 0
    %103 = vmatpush1.bf16.msra.mxu0 0
    %104 = vmatprep.subr.bf16.mxu0 0
    %105 = vmatpush1.bf16.msra.mxu0 0
    %106 = vmatprep.subr.bf16.mxu0 0
    %107 = vmatpush1.bf16.msra.mxu0 0
    %108 = vmatprep.subr.bf16.mxu0 0
    %109 = vmatpush1.bf16.msra.mxu0 0
    %110 = vmatprep.subr.bf16.mxu0 0
    %111 = vmatpush1.bf16.msra.mxu0 0
    %112 = vmatprep.subr.bf16.mxu0 0
    %113 = vmatpush1.bf16.msra.mxu0 0
    %114 = vmatprep.subr.bf16.mxu0 0
    %115 = vmatpush1.bf16.msra.mxu0 0
    %116 = vmatprep.subr.bf16.mxu0 0
    %117 = vmatpush1.bf16.msra.mxu0 0
    %118 = vmatprep.subr.bf16.mxu0 0
    %119 = vmatpush1.bf16.msra.mxu0 0
    %120 = vmatprep.subr.bf16.mxu0 0
    %121 = vmatpush1.bf16.msra.mxu0 0
    %122 = vmatprep.subr.bf16.mxu0 0
    %123 = vmatpush1.bf16.msra.mxu0 0
    %124 = vmatprep.subr.bf16.mxu0 0
    %125 = vmatpush1.bf16.msra.mxu0 0
    %126 = vmatprep.subr.bf16.mxu0 0
    %127 = vmatpush1.bf16.msra.mxu0 0
    %128 = vmatprep.subr.bf16.mxu0 0
    %129 = vmatpush1.bf16.msra.mxu0 0
    %130 = vmatprep.mubr.bf16.mxu0 0
    %131 = vmatmul.mubr.bf16.gmra.mrb[0].mxu0 %v96
    %v132 = vpop.f32.mrb[0].mxu0
    %v133 = vadd.f32 %v80, %v132
    %v134 = vpop.f32.mrb[0].mxu0
    %v135 = vpop.f32.mrb[0].mxu0
    %v136 = vpop.f32.mrb[0].mxu0
    %137 = vdwg.mxu0
    %vm138 = vcmp.gt.f32.partialorder %v133, 0.0
    %v139 = vmul.f32 %v133, 0.2
    %v140 = vsel %vm138, %v133, %v139
    %v141 = vpack.c.bf16 %v140, %v140
    %v142 = vld [vmem:[#allocation8] sm:$0xf]
    %v143 = vld [vmem:[#allocation8 + $0x4] sm:$0xf]
    %v144 = vld [vmem:[#allocation8 + $0x8] sm:$0xf]
    %v145 = vld [vmem:[#allocation8 + $0xc] sm:$0xf]
    %v146 = vld [vmem:[#allocation8 + $0x10] sm:$0xf]
    %v147 = vld [vmem:[#allocation8 + $0x14] sm:$0xf]
    %v148 = vld [vmem:[#allocation8 + $0x18] sm:$0xf]
    %v149 = vld [vmem:[#allocation8 + $0x1c] sm:$0xf]
    %v150 = vld [vmem:[#allocation8 + $0x20] sm:$0xf]
    %v151 = vld [vmem:[#allocation8 + $0x24] sm:$0xf]
    %v152 = vld [vmem:[#allocation8 + $0x28] sm:$0xf]
    %v153 = vld [vmem:[#allocation8 + $0x2c] sm:$0xf]
    %v154 = vld [vmem:[#allocation8 + $0x30] sm:$0xf]
    %v155 = vld [vmem:[#allocation8 + $0x34] sm:$0xf]
    %v156 = vld [vmem:[#allocation8 + $0x38] sm:$0xf]
    %v157 = vld [vmem:[#allocation8 + $0x3c] sm:$0xf]
    %v158 = vld [vmem:[%s4] sm:$0x1]
    %v160 = vlaneseq
    %v161 = vshrl.u32 %v160, 7
    %v162 = vsub.s32 0, %v161
    %v163 = vrot.slane %v158, %v162
    %v181 = vunpack.c.l.b16 %v142
    %v182 = vunpack.c.l.b16 %v143
    %v183 = vunpack.c.l.b16 %v144
    %v184 = vunpack.c.l.b16 %v145
    %v185 = vunpack.c.l.b16 %v146
    %v186 = vunpack.c.l.b16 %v147
    %v187 = vunpack.c.l.b16 %v148
    %v188 = vunpack.c.l.b16 %v149
    %v189 = vunpack.c.l.b16 %v150
    %v190 = vunpack.c.l.b16 %v151
    %v191 = vunpack.c.l.b16 %v152
    %v192 = vunpack.c.l.b16 %v153
    %v193 = vunpack.c.l.b16 %v154
    %v194 = vunpack.c.l.b16 %v155
    %v195 = vunpack.c.l.b16 %v156
    %v196 = vunpack.c.l.b16 %v157
    %v197 = vpack.c.b16 %v182, %v181
    %v198 = vpack.c.b16 %v184, %v183
    %v199 = vpack.c.b16 %v186, %v185
    %v200 = vpack.c.b16 %v188, %v187
    %v201 = vpack.c.b16 %v190, %v189
    %v202 = vpack.c.b16 %v192, %v191
    %v203 = vpack.c.b16 %v194, %v193
    %v204 = vpack.c.b16 %v196, %v195
    %213 = vmatprep.subr.bf16.mxu0 0
    %214 = vmatpush1.bf16.msra.mxu0 %v197
    %215 = vmatprep.subr.bf16.mxu0 0
    %216 = vmatpush1.bf16.msra.mxu0 %v198
    %217 = vmatprep.subr.bf16.mxu0 0
    %218 = vmatpush1.bf16.msra.mxu0 %v199
    %219 = vmatprep.subr.bf16.mxu0 0
    %220 = vmatpush1.bf16.msra.mxu0 %v200
    %221 = vmatprep.subr.bf16.mxu0 0
    %222 = vmatpush1.bf16.msra.mxu0 %v201
    %223 = vmatprep.subr.bf16.mxu0 0
    %224 = vmatpush1.bf16.msra.mxu0 %v202
    %225 = vmatprep.subr.bf16.mxu0 0
    %226 = vmatpush1.bf16.msra.mxu0 %v203
    %227 = vmatprep.subr.bf16.mxu0 0
    %228 = vmatpush1.bf16.msra.mxu0 %v204
    %229 = vmatprep.subr.bf16.mxu0 0
    %230 = vmatpush1.bf16.msra.mxu0 0
    %231 = vmatprep.subr.bf16.mxu0 0
    %232 = vmatpush1.bf16.msra.mxu0 0
    %233 = vmatprep.subr.bf16.mxu0 0
    %234 = vmatpush1.bf16.msra.mxu0 0
    %235 = vmatprep.subr.bf16.mxu0 0
    %236 = vmatpush1.bf16.msra.mxu0 0
    %237 = vmatprep.subr.bf16.mxu0 0
    %238 = vmatpush1.bf16.msra.mxu0 0
    %239 = vmatprep.subr.bf16.mxu0 0
    %240 = vmatpush1.bf16.msra.mxu0 0
    %241 = vmatprep.subr.bf16.mxu0 0
    %242 = vmatpush1.bf16.msra.mxu0 0
    %243 = vmatprep.subr.bf16.mxu0 0
    %244 = vmatpush1.bf16.msra.mxu0 0
    %245 = vmatprep.mubr.bf16.mxu0 0
    %246 = vmatmul.mubr.bf16.gmra.mrb[0].mxu0 %v141
    %v247 = vpop.f32.mrb[0].mxu0
    %v248 = vadd.f32 %v163, %v247
    %v249 = vpop.f32.mrb[0].mxu0
    %v250 = vpop.f32.mrb[0].mxu0
    %v251 = vpop.f32.mrb[0].mxu0
    %252 = vdwg.mxu0
    %vm253 = vcmp.gt.f32.partialorder %v248, 0.0
    %v254 = vmul.f32 %v248, 0.2
    %v255 = vsel %vm253, %v248, %v254
    %v256 = vld [vmem:[%s5] sm:$0x1]
    %v257 = vld [vmem:[#allocation2] sm:$0x1]
    %259 = vset.pattern.permute.xlu0 0
    %260 = vperm.xlu0 %259, %v257
    %v261 = vpop.permute.xlu0 %260
    %v263 = vlaneseq
    %v264 = vshrl.u32 %v263, 7
    %v265 = vsub.s32 0, %v264
    %v266 = vrot.slane %v261, %v265
    %267 = vmatprep.subr.mxu0 0.0
    %268 = vmatpush1.xpose.msra.mxu0 %v255
    %269 = vmatprep.subr.mxu0 0.0
    %270 = vmatpush1.xpose.msra.mxu0 0.0
    %271 = vmatprep.subr.mxu0 0.0
    %272 = vmatpush1.xpose.msra.mxu0 0.0
    %273 = vmatprep.subr.mxu0 0.0
    %274 = vmatpush1.xpose.msra.mxu0 0.0
    %275 = vmatprep.subr.mxu0 0.0
    %276 = vmatpush1.xpose.msra.mxu0 0.0
    %277 = vmatprep.subr.mxu0 0.0
    %278 = vmatpush1.xpose.msra.mxu0 0.0
    %279 = vmatprep.subr.mxu0 0.0
    %280 = vmatpush1.xpose.msra.mxu0 0.0
    %281 = vmatprep.subr.mxu0 0.0
    %282 = vmatpush1.xpose.msra.mxu0 0.0
    %283 = vmatprep.subr.mxu0 0.0
    %284 = vmatpush1.xpose.msra.mxu0 0.0
    %285 = vmatprep.subr.mxu0 0.0
    %286 = vmatpush1.xpose.msra.mxu0 0.0
    %287 = vmatprep.subr.mxu0 0.0
    %288 = vmatpush1.xpose.msra.mxu0 0.0
    %289 = vmatprep.subr.mxu0 0.0
    %290 = vmatpush1.xpose.msra.mxu0 0.0
    %291 = vmatprep.subr.mxu0 0.0
    %292 = vmatpush1.xpose.msra.mxu0 0.0
    %293 = vmatprep.subr.mxu0 0.0
    %294 = vmatpush1.xpose.msra.mxu0 0.0
    %295 = vmatprep.subr.mxu0 0.0
    %296 = vmatpush1.xpose.msra.mxu0 0.0
    %297 = vmatprep.subr.mxu0 0.0
    %298 = vmatpush1.xpose.msra.mxu0 0.0
    %299 = vmatprep.subr.mxu0 0.0
    %300 = vmatpush1.xpose.msra.mxu0 0.0
    %301 = vmatprep.subr.mxu0 0.0
    %302 = vmatpush1.xpose.msra.mxu0 0.0
    %303 = vmatprep.subr.mxu0 0.0
    %304 = vmatpush1.xpose.msra.mxu0 0.0
    %305 = vmatprep.subr.mxu0 0.0
    %306 = vmatpush1.xpose.msra.mxu0 0.0
    %307 = vmatprep.subr.mxu0 0.0
    %308 = vmatpush1.xpose.msra.mxu0 0.0
    %309 = vmatprep.subr.mxu0 0.0
    %310 = vmatpush1.xpose.msra.mxu0 0.0
    %311 = vmatprep.subr.mxu0 0.0
    %312 = vmatpush1.xpose.msra.mxu0 0.0
    %313 = vmatprep.subr.mxu0 0.0
    %314 = vmatpush1.xpose.msra.mxu0 0.0
    %315 = vmatprep.subr.mxu0 0.0
    %316 = vmatpush1.xpose.msra.mxu0 0.0
    %317 = vmatprep.subr.mxu0 0.0
    %318 = vmatpush1.xpose.msra.mxu0 0.0
    %319 = vmatprep.subr.mxu0 0.0
    %320 = vmatpush1.xpose.msra.mxu0 0.0
    %321 = vmatprep.subr.mxu0 0.0
    %322 = vmatpush1.xpose.msra.mxu0 0.0
    %323 = vmatprep.subr.mxu0 0.0
    %324 = vmatpush1.xpose.msra.mxu0 0.0
    %325 = vmatprep.subr.mxu0 0.0
    %326 = vmatpush1.xpose.msra.mxu0 0.0
    %327 = vmatprep.subr.mxu0 0.0
    %328 = vmatpush1.xpose.msra.mxu0 0.0
    %329 = vmatprep.subr.mxu0 0.0
    %330 = vmatpush1.xpose.msra.mxu0 0.0
    %331 = vmatprep.mubr.f32.mxu0 0.0
    %332 = vmatmul.mubr.f32.gmra.mrb[0].mxu0 %v256
    %v333 = vpop.f32.mrb[0].mxu0
    %v334 = vadd.f32 %v266, %v333
    %v335 = vpop.f32.mrb[0].mxu0
    %336 = vdwg.mxu0
    %v337 = vand.u32 2147483647, %v334
    %v338 = vsub.f32 0.0, %v337
    %v339 = vmul.f32 %v338, 1.442695
    %v340 = vpow.pop %v339
    %v341 = vadd.f32 %v340, 1.0
    %v342 = vrcp.pop %v341
    %vm343 = vcmp.ge.f32.partialorder %v334, 0.0
    %v344 = vmul.f32 %v340, %v342
    %v345 = vsel %vm343, %v342, %v344
    %vm346 = vcmask 57344
    %347 = vst.msk [vmem:[#allocation9] sm:$0x1] %vm346, %v345
    // Predicated region
    $region42: #{tpu_custom_call.1} parent=1 // pred_check
      _
    $region43: #{tpu_custom_call.1} parent=1 // pred_check_branch
      %349 = sbr.rel (0) target = $region45
    $region44: #{tpu_custom_call.1} parent=1 // pred_region
      %s351 = ssub.s32 16, 16
      %352 = vsyncadd [#allocation5], %s351
      %s354 = sshll.u32 [#allocation9], 4
      %s355 = int_to_ptr.vmem [resolvable:$true] %s354
      %357 = dma.vmem_to_hbm [thread:$0]  %s355, 16, %s7, [#allocation5]
    $region45: #{tpu_custom_call.1} parent=1 // pred_fallthru
      _
    // Predicated region
    $region46: #{tpu_custom_call.1} parent=1 // pred_check
      _
    $region47: #{tpu_custom_call.1} parent=1 // pred_check_branch
      %359 = sbr.rel (0) target = $region49
    $region48: #{tpu_custom_call.1} parent=1 // pred_region
      %360 = dma.done [#allocation5], 16
    $region49: #{tpu_custom_call.1} parent=1 // pred_fallthru
      _
    %361 = vsyncpa [#allocation4], 1
    %362 = vsyncpa [#allocation7], 1
    %363 = vsyncpa [#allocation5], 1

</llo_original>
